<compile_context>
chip_gen: v5e
topology: v5e:2x2
jax: 0.10.0
libtpu: 0.0.40
codegen_flags: <defaults>
</compile_context>

<pallas_src>
import numpy as np
import jax
import jax.numpy as jnp
from jax.experimental import pallas as pl
from jax.experimental.pallas import tpu as pltpu

BN_EPS = 1e-5
_HI = jax.lax.Precision.HIGHEST


def _round_up(x, m):
    return (x + m - 1) // m * m


# --------------------------------------------------------------------------
# Separable bilinear interpolation matrices matching
# torch.nn.functional.interpolate(mode='bilinear', align_corners=False).
# --------------------------------------------------------------------------
def bilinear_matrix(out_size, in_size, dtype=jnp.float32):
    scale = in_size / out_size
    i = jnp.arange(out_size, dtype=jnp.float32)
    src = jnp.maximum(scale * (i + 0.5) - 0.5, 0.0)   # PyTorch clamps negatives
    i0 = jnp.minimum(jnp.floor(src).astype(jnp.int32), in_size - 1)
    i1 = jnp.minimum(i0 + 1, in_size - 1)
    frac = src - i0.astype(jnp.float32)
    m = jnp.zeros((out_size, in_size), dtype)
    rows = jnp.arange(out_size)
    m = m.at[rows, i0].add(1.0 - frac)
    m = m.at[rows, i1].add(frac)
    return m


def _fold_conv3x3_weight(w_oihw, bn_scale):
    """(O, I, 3, 3) conv weight * eval-BN scale -> (O, 9*I) bf16.

    Column ordering matches the in-kernel tap loop: index (ky*3 + kx)*I + c.
    """
    o, i, _, _ = w_oihw.shape
    w = w_oihw * bn_scale[:, None, None, None]
    w = jnp.transpose(w, (0, 2, 3, 1)).reshape(o, 9 * i)
    return w.astype(jnp.bfloat16)


def _vmem_limit_bytes(block_bytes, scratch_bytes):
    """Explicit scoped-VMEM limit: double-buffered blocks + scratch, with
    generous headroom, clamped to a range valid on v5e/v6e/v7x."""
    est = 2 * block_bytes + scratch_bytes
    return int(min(max(4 * est, 16 * 1024 * 1024), 48 * 1024 * 1024))


# --------------------------------------------------------------------------
# Shared in-kernel tail: 3x3 conv (pad=1, bias-free) + folded eval-BN + ReLU.
#
# `pre_bf16` is a bf16 (Cin, H*W) image.  The 1-pixel halo is realized by
# writing it at lane offset `base` (128-aligned) into a flat bf16 VMEM row;
# only the two (W+1)-wide halo strips the nine lane-shifted windows can touch
# are zeroed (the interior is fully overwritten every grid step, so this is
# also safe under megacore splitting of the "parallel" batch axis).  The conv
# is NINE accumulated MXU matmuls (one per tap, K = Cin) read straight from
# pad_ref -- no im2col materialization, accumulation in f32.
# --------------------------------------------------------------------------
def _conv3x3_bn_relu_tail(pre_bf16, wf_ref, bias_ref, pad_ref, cin, H, W, base):
    HW = H * W
    cout = wf_ref.shape[0]

    halo = jnp.zeros((cin, W + 1), jnp.bfloat16)
    pad_ref[:, base - (W + 1):base] = halo              # top halo strip
    pad_ref[:, base + HW:base + HW + W + 1] = halo      # bottom halo strip
    pad_ref[:, base:base + HW] = pre_bf16               # 128-aligned interior

    # W-boundary masks built in-kernel (kill the lane wrap of the dx = +/-1
    # windows at w == 0 / w == W-1); no image-sized constant DMA.
    lane = jax.lax.broadcasted_iota(jnp.int32, (1, HW), 1)
    if W & (W - 1) == 0:
        w_idx = jnp.bitwise_and(lane, W - 1)
    else:
        w_idx = lane % W
    not_left = w_idx != 0
    not_right = w_idx != W - 1

    acc = jnp.zeros((cout, HW), jnp.float32)
    t = 0
    for dy in (-1, 0, 1):
        for dx in (-1, 0, 1):
            start = base + dy * W + dx                   # static lane offset
            patch = pad_ref[:, start:start + HW]         # (cin, HW) bf16 view
            if dx == -1:
                patch = jnp.where(not_left, patch, jnp.zeros_like(patch))
            elif dx == 1:
                patch = jnp.where(not_right, patch, jnp.zeros_like(patch))
            acc = acc + jnp.dot(wf_ref[:, t * cin:(t + 1) * cin], patch,
                                preferred_element_type=jnp.float32)
            t += 1
    return jnp.maximum(acc + bias_ref[...], 0.0)         # f32, bias = BN shift


# --------------------------------------------------------------------------
# Fused per-stage kernel: large-path 1x1 conv + add + 3x3 conv + BN + ReLU.
# (The small-path 1x1 conv + bilinear upsample are hoisted to the wrapper.)
# --------------------------------------------------------------------------
def make_fuse_stage_kernel(C, C2, H, W, base):
    def kernel(s_ref, l_ref, wl_ref, wf_ref, bias_ref, o_ref, pad_ref):
        # 1x1 conv on the large path: (C, C2) @ (C2, HW), bf16 in / f32 acc.
        b = jnp.dot(wl_ref[...], l_ref[0], preferred_element_type=jnp.float32)
        pre = s_ref[0].astype(jnp.float32) + b           # f32 elementwise
        y = _conv3x3_bn_relu_tail(pre.astype(jnp.bfloat16), wf_ref, bias_ref,
                                  pad_ref, C, H, W, base)
        o_ref[0] = y.astype(o_ref.dtype)
    return kernel


def fuse_stage(x_small, x_large, params):
    """One UpSample_P2P stage; x_small / x_large are NCHW (f32 or bf16)."""
    N, C1, Hs, Ws = x_small.shape
    _, C2, Hl, Wl = x_large.shape
    C = params["w_small"].shape[0]
    HW = Hl * Wl
    base = _round_up(Wl + 1, 128)                        # lane-aligned interior
    P = base + HW + Wl + 1                               # padded row length

    # Small path: 1x1 conv_small fused with the separable bilinear upsample in
    # a single XLA einsum (f32, HIGHEST).  This matches the module order
    # (conv then interpolate), removes the in-kernel lane<->sublane relayouts
    # and keeps the HBM tensor at the small output channel count C.
    mh = bilinear_matrix(Hl, Hs)
    mw = bilinear_matrix(Wl, Ws)
    s_up = jnp.einsum("oc,ah,bw,nchw->noab",
                      params["w_small"].astype(jnp.float32), mh, mw,
                      x_small.astype(jnp.float32), precision=_HI)
    s_up = s_up.reshape(N, C, HW).astype(jnp.bfloat16)   # bf16 HBM I/O
    l_f = x_large.reshape(N, C2, HW).astype(jnp.bfloat16)

    w_lg = params["w_large"].astype(jnp.bfloat16)            # (C, C2)
    wf = _fold_conv3x3_weight(params["w_fuse"], params["scale"])  # (C, 9C)
    bias = params["shift"].reshape(C, 1).astype(jnp.float32)

    flops = 2 * N * HW * (C * C2 + 9 * C * C)
    bytes_accessed = int((s_up.size + l_f.size + N * C * HW) * 2
                         + w_lg.size * 2 + wf.size * 2 + bias.size * 4)
    block_bytes = ((C * HW + C2 * HW + C * HW) * 2
                   + (C * C2 + 9 * C * C) * 2 + C * 4)
    vmem_limit = _vmem_limit_bytes(block_bytes, C * P * 2)

    out = pl.pallas_call(
        make_fuse_stage_kernel(C, C2, Hl, Wl, base),
        out_shape=jax.ShapeDtypeStruct((N, C, HW), jnp.bfloat16),
        grid=(N,),
        in_specs=[
            pl.BlockSpec((1, C, HW), lambda n: (n, 0, 0)),
            pl.BlockSpec((1, C2, HW), lambda n: (n, 0, 0)),
            pl.BlockSpec((C, C2), lambda n: (0, 0)),
            pl.BlockSpec((C, 9 * C), lambda n: (0, 0)),
            pl.BlockSpec((C, 1), lambda n: (0, 0)),
        ],
        out_specs=pl.BlockSpec((1, C, HW), lambda n: (n, 0, 0)),
        scratch_shapes=[pltpu.VMEM((C, P), jnp.bfloat16)],   # flat-padded 'pre'
        compiler_params=pltpu.CompilerParams(
            dimension_semantics=("parallel",),
            vmem_limit_bytes=vmem_limit),
        cost_estimate=pl.CostEstimate(flops=flops, transcendentals=0,
                                      bytes_accessed=bytes_accessed),
    )(s_up, l_f, w_lg, wf, bias)
    return out.reshape(N, C, Hl, Wl)


# --------------------------------------------------------------------------
# Post-process kernel: 3x3 conv + BN + ReLU (same in-kernel machinery).
# --------------------------------------------------------------------------
def make_conv3x3_kernel(Cin, H, W, base):
    def kernel(x_ref, wf_ref, bias_ref, o_ref, pad_ref):
        y = _conv3x3_bn_relu_tail(x_ref[0], wf_ref, bias_ref, pad_ref,
                                  Cin, H, W, base)
        o_ref[0] = y.astype(o_ref.dtype)
    return kernel


def conv3x3_bn_relu(x, w_oihw, bn_scale, bn_shift):
    N, Cin, H, W = x.shape
    Cout = w_oihw.shape[0]
    HW = H * W
    base = _round_up(W + 1, 128)
    P = base + HW + W + 1

    wf = _fold_conv3x3_weight(w_oihw, bn_scale)
    bias = bn_shift.reshape(Cout, 1).astype(jnp.float32)
    x_f = x.reshape(N, Cin, HW).astype(jnp.bfloat16)

    flops = 2 * N * HW * 9 * Cin * Cout
    bytes_accessed = int(x_f.size * 2 + N * Cout * HW * 4
                         + wf.size * 2 + bias.size * 4)
    block_bytes = Cin * HW * 2 + Cout * HW * 4 + 9 * Cin * Cout * 2 + Cout * 4
    vmem_limit = _vmem_limit_bytes(block_bytes, Cin * P * 2)

    out = pl.pallas_call(
        make_conv3x3_kernel(Cin, H, W, base),
        out_shape=jax.ShapeDtypeStruct((N, Cout, HW), jnp.float32),
        grid=(N,),
        in_specs=[
            pl.BlockSpec((1, Cin, HW), lambda n: (n, 0, 0)),
            pl.BlockSpec((Cout, 9 * Cin), lambda n: (0, 0)),
            pl.BlockSpec((Cout, 1), lambda n: (0, 0)),
        ],
        out_specs=pl.BlockSpec((1, Cout, HW), lambda n: (n, 0, 0)),
        scratch_shapes=[pltpu.VMEM((Cin, P), jnp.bfloat16)],
        compiler_params=pltpu.CompilerParams(
            dimension_semantics=("parallel",),
            vmem_limit_bytes=vmem_limit),
        cost_estimate=pl.CostEstimate(flops=flops, transcendentals=0,
                                      bytes_accessed=bytes_accessed),
    )(x_f, wf, bias)
    return out.reshape(N, Cout, H, W)


# --------------------------------------------------------------------------
# Full UpSample_P2PS forward (NCHW, bn=True, post_process=True, eval-mode BN).
# --------------------------------------------------------------------------
def upsample_p2ps_forward(xs_nchw, fuse_params, post_params):
    xs = xs_nchw[::-1]
    x0 = xs[0]
    for x, p in zip(xs[1:], fuse_params):
        x0 = fuse_stage(x0, x, p)
    return conv3x3_bn_relu(x0, post_params["w"], post_params["scale"],
                           post_params["shift"])


# --------------------------------------------------------------------------
# Pure-JAX reference (f32, HIGHEST precision) for checking the Pallas kernels.
# --------------------------------------------------------------------------
def _ref_conv1x1(x, w):
    return jnp.einsum("oc,nchw->nohw", w, x, precision=_HI)


def _ref_bilinear(x, Hl, Wl):
    _, _, Hs, Ws = x.shape
    mh = bilinear_matrix(Hl, Hs)
    mw = bilinear_matrix(Wl, Ws)
    return jnp.einsum("ah,bw,nchw->ncab", mh, mw, x, precision=_HI)


def _ref_conv3x3_bn_relu(x, w, scale, shift):
    y = jax.lax.conv_general_dilated(
        x, w, (1, 1), ((1, 1), (1, 1)),
        dimension_numbers=("NCHW", "OIHW", "NCHW"), precision=_HI)
    y = y * scale[None, :, None, None] + shift[None, :, None, None]
    return jnp.maximum(y, 0.0)


def upsample_p2ps_ref(xs_nchw, fuse_params, post_params):
    xs = xs_nchw[::-1]
    x0 = xs[0]
    for x, p in zip(xs[1:], fuse_params):
        a = _ref_conv1x1(x0, p["w_small"])
        a = _ref_bilinear(a, x.shape[2], x.shape[3])
        b = _ref_conv1x1(x, p["w_large"])
        x0 = _ref_conv3x3_bn_relu(a + b, p["w_fuse"], p["scale"], p["shift"])
    return _ref_conv3x3_bn_relu(x0, post_params["w"], post_params["scale"],
                                post_params["shift"])


# --------------------------------------------------------------------------
if __name__ == "__main__":
    key = jax.random.PRNGKey(0)
    keys = jax.random.split(key, 32)
    kit = iter(range(32))

    # Pyramid config (channels shallow->deep, spatial shallow->deep), NCHW.
    incs = [16, 32, 64]
    spatial = [16, 8, 4]
    N = 2
    out_channel_factor = 2

    xs_nchw = [
        jax.random.normal(keys[next(kit)], (N, c, s, s), jnp.float32)
        for c, s in zip(incs, spatial)
    ]

    # Deterministic parameters (shapes follow UpSample_P2PS.__init__ with
    # bn=True => bias-free convs; BN uses fresh eval-mode running stats).
    def folded_bn(c):
        gamma = jnp.ones((c,), jnp.float32)
        beta = jnp.zeros((c,), jnp.float32)
        rmean = jnp.zeros((c,), jnp.float32)
        rvar = jnp.ones((c,), jnp.float32)
        scale = gamma / jnp.sqrt(rvar + BN_EPS)
        shift = beta - rmean * scale
        return scale, shift

    rincs = incs[::-1]                       # [64, 32, 16]
    last_out = rincs[0]
    fuse_params = []
    for inc in rincs[1:]:
        ouc = inc // out_channel_factor
        w_small = jax.random.normal(keys[next(kit)], (ouc, last_out),
                                    jnp.float32) * (last_out ** -0.5)
        w_large = jax.random.normal(keys[next(kit)], (ouc, inc),
                                    jnp.float32) * (inc ** -0.5)
        w_fuse = jax.random.normal(keys[next(kit)], (ouc, ouc, 3, 3),
                                   jnp.float32) * ((9 * ouc) ** -0.5)
        scale, shift = folded_bn(ouc)
        fuse_params.append(dict(w_small=w_small, w_large=w_large,
                                w_fuse=w_fuse, scale=scale, shift=shift))
        last_out = ouc

    w_pp = jax.random.normal(keys[next(kit)], (last_out, last_out, 3, 3),
                             jnp.float32) * ((9 * last_out) ** -0.5)
    pp_scale, pp_shift = folded_bn(last_out)
    post_params = dict(w=w_pp, scale=pp_scale, shift=pp_shift)

    # Run the Pallas implementation.
    out = upsample_p2ps_forward(xs_nchw, fuse_params, post_params)
    out = jax.block_until_ready(out)

    # Check against the pure-f32 reference.  Tolerance accounts for bf16 MXU
    # operands + bf16 inter-stage HBM activations (f32 accumulation inside).
    ref = upsample_p2ps_ref(xs_nchw, fuse_params, post_params)
    np.testing.assert_allclose(np.asarray(out), np.asarray(ref),
                               rtol=5e-2, atol=5e-2)

    assert out.shape == (N, last_out, spatial[0], spatial[0])
    assert bool(jnp.all(jnp.isfinite(out)))

    print("KERNEL_OK")
</pallas_src>

<mosaic_0001>
module attributes {stable_mosaic.version = 11 : i64} {
  func.func @kernel(%arg0: i32, %arg1: memref<1x16x64xbf16, #tpu.memory_space<vmem>>, %arg2: memref<1x32x64xbf16, #tpu.memory_space<vmem>>, %arg3: memref<16x32xbf16, #tpu.memory_space<vmem>>, %arg4: memref<16x144xbf16, #tpu.memory_space<vmem>>, %arg5: memref<16x1xf32, #tpu.memory_space<vmem>>, %arg6: memref<1x16x64xbf16, #tpu.memory_space<vmem>>, %arg7: memref<16x201xbf16, #tpu.memory_space<vmem>>) attributes {dimension_semantics = [#tpu.dimension_semantics<parallel>], iteration_bounds = array<i64: 2>, scalar_prefetch = 0 : i64, scratch_operands = 1 : i64, tpu.core_type = #tpu.core_type<tc>, window_params = [{transform_indices = @transform_0, window_bounds = array<i64: 1, 16, 64>}, {transform_indices = @transform_1, window_bounds = array<i64: 1, 32, 64>}, {pipeline_mode = #tpu.pipeline_mode<synchronous>, transform_indices = @transform_2, window_bounds = array<i64: 16, 32>}, {pipeline_mode = #tpu.pipeline_mode<synchronous>, transform_indices = @transform_3, window_bounds = array<i64: 16, 144>}, {pipeline_mode = #tpu.pipeline_mode<synchronous>, transform_indices = @transform_4, window_bounds = array<i64: 16, 1>}, {transform_indices = @transform_5, window_bounds = array<i64: 1, 16, 64>}]} {
    %c0 = arith.constant 0 : index
    %c0_0 = arith.constant 0 : index
    %0 = vector.load %arg3[%c0, %c0_0] : memref<16x32xbf16, #tpu.memory_space<vmem>>, vector<16x32xbf16>
    %c0_1 = arith.constant 0 : index
    %c0_2 = arith.constant 0 : index
    %c0_3 = arith.constant 0 : index
    %1 = vector.load %arg2[%c0_1, %c0_2, %c0_3] : memref<1x32x64xbf16, #tpu.memory_space<vmem>>, vector<1x32x64xbf16>
    %2 = vector.shape_cast %1 : vector<1x32x64xbf16> to vector<32x64xbf16>
    %cst = arith.constant dense<0.000000e+00> : vector<16x64xf32>
    %3 = tpu.matmul %0, %2, %cst {dimension_numbers = #tpu.dot_dimension_numbers<[1], [0], [0], [1], [0, 0, 1, 1], [], []>} : vector<16x32xbf16>, vector<32x64xbf16>, vector<16x64xf32> -> vector<16x64xf32>
    %c0_4 = arith.constant 0 : index
    %c0_5 = arith.constant 0 : index
    %c0_6 = arith.constant 0 : index
    %4 = vector.load %arg1[%c0_4, %c0_5, %c0_6] : memref<1x16x64xbf16, #tpu.memory_space<vmem>>, vector<1x16x64xbf16>
    %5 = vector.shape_cast %4 : vector<1x16x64xbf16> to vector<16x64xbf16>
    %6 = arith.extf %5 : vector<16x64xbf16> to vector<16x64xf32>
    %7 = arith.addf %6, %3 : vector<16x64xf32>
    %8 = arith.truncf %7 : vector<16x64xf32> to vector<16x64xbf16>
    %cst_7 = arith.constant 0.000000e+00 : bf16
    %9 = vector.broadcast %cst_7 : bf16 to vector<16x9xbf16>
    %c0_8 = arith.constant 0 : index
    %c119 = arith.constant 119 : index
    %10 = vector.load %arg7[%c0_8, %c119] : memref<16x201xbf16, #tpu.memory_space<vmem>>, vector<16x9xbf16>
    tpu.vector_store %arg7[%c0_8, %c119], %9 {strides = array<i32>} : memref<16x201xbf16, #tpu.memory_space<vmem>>, vector<16x9xbf16>,
    %c0_9 = arith.constant 0 : index
    %c192 = arith.constant 192 : index
    %11 = vector.load %arg7[%c0_9, %c192] : memref<16x201xbf16, #tpu.memory_space<vmem>>, vector<16x9xbf16>
    tpu.vector_store %arg7[%c0_9, %c192], %9 {strides = array<i32>} : memref<16x201xbf16, #tpu.memory_space<vmem>>, vector<16x9xbf16>,
    %c0_10 = arith.constant 0 : index
    %c128 = arith.constant 128 : index
    %12 = vector.load %arg7[%c0_10, %c128] : memref<16x201xbf16, #tpu.memory_space<vmem>>, vector<16x64xbf16>
    tpu.vector_store %arg7[%c0_10, %c128], %8 {strides = array<i32>} : memref<16x201xbf16, #tpu.memory_space<vmem>>, vector<16x64xbf16>,
    %13 = tpu.iota {dimensions = array<i32: 1>} : vector<1x64xi32>
    %c7_i32 = arith.constant 7 : i32
    %14 = vector.broadcast %c7_i32 : i32 to vector<1x64xi32>
    %15 = arith.andi %13, %14 : vector<1x64xi32>
    %c0_i32 = arith.constant 0 : i32
    %16 = vector.broadcast %c0_i32 : i32 to vector<1x64xi32>
    %17 = arith.cmpi ne, %15, %16 : vector<1x64xi32>
    %c7_i32_11 = arith.constant 7 : i32
    %18 = vector.broadcast %c7_i32_11 : i32 to vector<1x64xi32>
    %19 = arith.cmpi ne, %15, %18 : vector<1x64xi32>
    %cst_12 = arith.constant 0.000000e+00 : f32
    %20 = vector.broadcast %cst_12 : f32 to vector<16x64xf32>
    %c0_13 = arith.constant 0 : index
    %c119_14 = arith.constant 119 : index
    %21 = vector.load %arg7[%c0_13, %c119_14] : memref<16x201xbf16, #tpu.memory_space<vmem>>, vector<16x64xbf16>
    %cst_15 = arith.constant 0.000000e+00 : bf16
    %22 = vector.broadcast %cst_15 : bf16 to vector<16x64xbf16>
    %23 = vector.shape_cast %17 : vector<1x64xi1> to vector<1x64xi1>
    %24 = vector.broadcast %23 : vector<1x64xi1> to vector<16x64xi1>
    %25 = arith.select %24, %21, %22 : vector<16x64xi1>, vector<16x64xbf16>
    %c0_16 = arith.constant 0 : index
    %c0_17 = arith.constant 0 : index
    %26 = vector.load %arg4[%c0_16, %c0_17] : memref<16x144xbf16, #tpu.memory_space<vmem>>, vector<16x16xbf16>
    %cst_18 = arith.constant dense<0.000000e+00> : vector<16x64xf32>
    %27 = tpu.matmul %26, %25, %cst_18 {dimension_numbers = #tpu.dot_dimension_numbers<[1], [0], [0], [1], [0, 0, 1, 1], [], []>} : vector<16x16xbf16>, vector<16x64xbf16>, vector<16x64xf32> -> vector<16x64xf32>
    %28 = arith.addf %20, %27 : vector<16x64xf32>
    %c0_19 = arith.constant 0 : index
    %c120 = arith.constant 120 : index
    %29 = vector.load %arg7[%c0_19, %c120] : memref<16x201xbf16, #tpu.memory_space<vmem>>, vector<16x64xbf16>
    %c0_20 = arith.constant 0 : index
    %c16 = arith.constant 16 : index
    %30 = vector.load %arg4[%c0_20, %c16] : memref<16x144xbf16, #tpu.memory_space<vmem>>, vector<16x16xbf16>
    %cst_21 = arith.constant dense<0.000000e+00> : vector<16x64xf32>
    %31 = tpu.matmul %30, %29, %cst_21 {dimension_numbers = #tpu.dot_dimension_numbers<[1], [0], [0], [1], [0, 0, 1, 1], [], []>} : vector<16x16xbf16>, vector<16x64xbf16>, vector<16x64xf32> -> vector<16x64xf32>
    %32 = arith.addf %28, %31 : vector<16x64xf32>
    %c0_22 = arith.constant 0 : index
    %c121 = arith.constant 121 : index
    %33 = vector.load %arg7[%c0_22, %c121] : memref<16x201xbf16, #tpu.memory_space<vmem>>, vector<16x64xbf16>
    %cst_23 = arith.constant 0.000000e+00 : bf16
    %34 = vector.broadcast %cst_23 : bf16 to vector<16x64xbf16>
    %35 = vector.shape_cast %19 : vector<1x64xi1> to vector<1x64xi1>
    %36 = vector.broadcast %35 : vector<1x64xi1> to vector<16x64xi1>
    %37 = arith.select %36, %33, %34 : vector<16x64xi1>, vector<16x64xbf16>
    %c0_24 = arith.constant 0 : index
    %c32 = arith.constant 32 : index
    %38 = vector.load %arg4[%c0_24, %c32] : memref<16x144xbf16, #tpu.memory_space<vmem>>, vector<16x16xbf16>
    %cst_25 = arith.constant dense<0.000000e+00> : vector<16x64xf32>
    %39 = tpu.matmul %38, %37, %cst_25 {dimension_numbers = #tpu.dot_dimension_numbers<[1], [0], [0], [1], [0, 0, 1, 1], [], []>} : vector<16x16xbf16>, vector<16x64xbf16>, vector<16x64xf32> -> vector<16x64xf32>
    %40 = arith.addf %32, %39 : vector<16x64xf32>
    %c0_26 = arith.constant 0 : index
    %c127 = arith.constant 127 : index
    %41 = vector.load %arg7[%c0_26, %c127] : memref<16x201xbf16, #tpu.memory_space<vmem>>, vector<16x64xbf16>
    %cst_27 = arith.constant 0.000000e+00 : bf16
    %42 = vector.broadcast %cst_27 : bf16 to vector<16x64xbf16>
    %43 = vector.shape_cast %17 : vector<1x64xi1> to vector<1x64xi1>
    %44 = vector.broadcast %43 : vector<1x64xi1> to vector<16x64xi1>
    %45 = arith.select %44, %41, %42 : vector<16x64xi1>, vector<16x64xbf16>
    %c0_28 = arith.constant 0 : index
    %c48 = arith.constant 48 : index
    %46 = vector.load %arg4[%c0_28, %c48] : memref<16x144xbf16, #tpu.memory_space<vmem>>, vector<16x16xbf16>
    %cst_29 = arith.constant dense<0.000000e+00> : vector<16x64xf32>
    %47 = tpu.matmul %46, %45, %cst_29 {dimension_numbers = #tpu.dot_dimension_numbers<[1], [0], [0], [1], [0, 0, 1, 1], [], []>} : vector<16x16xbf16>, vector<16x64xbf16>, vector<16x64xf32> -> vector<16x64xf32>
    %48 = arith.addf %40, %47 : vector<16x64xf32>
    %c0_30 = arith.constant 0 : index
    %c128_31 = arith.constant 128 : index
    %49 = vector.load %arg7[%c0_30, %c128_31] : memref<16x201xbf16, #tpu.memory_space<vmem>>, vector<16x64xbf16>
    %c0_32 = arith.constant 0 : index
    %c64 = arith.constant 64 : index
    %50 = vector.load %arg4[%c0_32, %c64] : memref<16x144xbf16, #tpu.memory_space<vmem>>, vector<16x16xbf16>
    %cst_33 = arith.constant dense<0.000000e+00> : vector<16x64xf32>
    %51 = tpu.matmul %50, %49, %cst_33 {dimension_numbers = #tpu.dot_dimension_numbers<[1], [0], [0], [1], [0, 0, 1, 1], [], []>} : vector<16x16xbf16>, vector<16x64xbf16>, vector<16x64xf32> -> vector<16x64xf32>
    %52 = arith.addf %48, %51 : vector<16x64xf32>
    %c0_34 = arith.constant 0 : index
    %c129 = arith.constant 129 : index
    %53 = vector.load %arg7[%c0_34, %c129] : memref<16x201xbf16, #tpu.memory_space<vmem>>, vector<16x64xbf16>
    %cst_35 = arith.constant 0.000000e+00 : bf16
    %54 = vector.broadcast %cst_35 : bf16 to vector<16x64xbf16>
    %55 = vector.shape_cast %19 : vector<1x64xi1> to vector<1x64xi1>
    %56 = vector.broadcast %55 : vector<1x64xi1> to vector<16x64xi1>
    %57 = arith.select %56, %53, %54 : vector<16x64xi1>, vector<16x64xbf16>
    %c0_36 = arith.constant 0 : index
    %c80 = arith.constant 80 : index
    %58 = vector.load %arg4[%c0_36, %c80] : memref<16x144xbf16, #tpu.memory_space<vmem>>, vector<16x16xbf16>
    %cst_37 = arith.constant dense<0.000000e+00> : vector<16x64xf32>
    %59 = tpu.matmul %58, %57, %cst_37 {dimension_numbers = #tpu.dot_dimension_numbers<[1], [0], [0], [1], [0, 0, 1, 1], [], []>} : vector<16x16xbf16>, vector<16x64xbf16>, vector<16x64xf32> -> vector<16x64xf32>
    %60 = arith.addf %52, %59 : vector<16x64xf32>
    %c0_38 = arith.constant 0 : index
    %c135 = arith.constant 135 : index
    %61 = vector.load %arg7[%c0_38, %c135] : memref<16x201xbf16, #tpu.memory_space<vmem>>, vector<16x64xbf16>
    %cst_39 = arith.constant 0.000000e+00 : bf16
    %62 = vector.broadcast %cst_39 : bf16 to vector<16x64xbf16>
    %63 = vector.shape_cast %17 : vector<1x64xi1> to vector<1x64xi1>
    %64 = vector.broadcast %63 : vector<1x64xi1> to vector<16x64xi1>
    %65 = arith.select %64, %61, %62 : vector<16x64xi1>, vector<16x64xbf16>
    %c0_40 = arith.constant 0 : index
    %c96 = arith.constant 96 : index
    %66 = vector.load %arg4[%c0_40, %c96] : memref<16x144xbf16, #tpu.memory_space<vmem>>, vector<16x16xbf16>
    %cst_41 = arith.constant dense<0.000000e+00> : vector<16x64xf32>
    %67 = tpu.matmul %66, %65, %cst_41 {dimension_numbers = #tpu.dot_dimension_numbers<[1], [0], [0], [1], [0, 0, 1, 1], [], []>} : vector<16x16xbf16>, vector<16x64xbf16>, vector<16x64xf32> -> vector<16x64xf32>
    %68 = arith.addf %60, %67 : vector<16x64xf32>
    %c0_42 = arith.constant 0 : index
    %c136 = arith.constant 136 : index
    %69 = vector.load %arg7[%c0_42, %c136] : memref<16x201xbf16, #tpu.memory_space<vmem>>, vector<16x64xbf16>
    %c0_43 = arith.constant 0 : index
    %c112 = arith.constant 112 : index
    %70 = vector.load %arg4[%c0_43, %c112] : memref<16x144xbf16, #tpu.memory_space<vmem>>, vector<16x16xbf16>
    %cst_44 = arith.constant dense<0.000000e+00> : vector<16x64xf32>
    %71 = tpu.matmul %70, %69, %cst_44 {dimension_numbers = #tpu.dot_dimension_numbers<[1], [0], [0], [1], [0, 0, 1, 1], [], []>} : vector<16x16xbf16>, vector<16x64xbf16>, vector<16x64xf32> -> vector<16x64xf32>
    %72 = arith.addf %68, %71 : vector<16x64xf32>
    %c0_45 = arith.constant 0 : index
    %c137 = arith.constant 137 : index
    %73 = vector.load %arg7[%c0_45, %c137] : memref<16x201xbf16, #tpu.memory_space<vmem>>, vector<16x64xbf16>
    %cst_46 = arith.constant 0.000000e+00 : bf16
    %74 = vector.broadcast %cst_46 : bf16 to vector<16x64xbf16>
    %75 = vector.shape_cast %19 : vector<1x64xi1> to vector<1x64xi1>
    %76 = vector.broadcast %75 : vector<1x64xi1> to vector<16x64xi1>
    %77 = arith.select %76, %73, %74 : vector<16x64xi1>, vector<16x64xbf16>
    %c0_47 = arith.constant 0 : index
    %c128_48 = arith.constant 128 : index
    %78 = vector.load %arg4[%c0_47, %c128_48] : memref<16x144xbf16, #tpu.memory_space<vmem>>, vector<16x16xbf16>
    %cst_49 = arith.constant dense<0.000000e+00> : vector<16x64xf32>
    %79 = tpu.matmul %78, %77, %cst_49 {dimension_numbers = #tpu.dot_dimension_numbers<[1], [0], [0], [1], [0, 0, 1, 1], [], []>} : vector<16x16xbf16>, vector<16x64xbf16>, vector<16x64xf32> -> vector<16x64xf32>
    %80 = arith.addf %72, %79 : vector<16x64xf32>
    %c0_50 = arith.constant 0 : index
    %c0_51 = arith.constant 0 : index
    %81 = vector.load %arg5[%c0_50, %c0_51] : memref<16x1xf32, #tpu.memory_space<vmem>>, vector<16x1xf32>
    %82 = vector.broadcast %81 : vector<16x1xf32> to vector<16x64xf32>
    %83 = arith.addf %80, %82 : vector<16x64xf32>
    %cst_52 = arith.constant 0.000000e+00 : f32
    %84 = vector.broadcast %cst_52 : f32 to vector<16x64xf32>
    %85 = arith.maximumf %83, %84 : vector<16x64xf32>
    %86 = arith.truncf %85 : vector<16x64xf32> to vector<16x64xbf16>
    %c0_53 = arith.constant 0 : index
    %c0_54 = arith.constant 0 : index
    %c0_55 = arith.constant 0 : index
    %87 = vector.load %arg6[%c0_53, %c0_54, %c0_55] : memref<1x16x64xbf16, #tpu.memory_space<vmem>>, vector<1x16x64xbf16>
    %88 = vector.shape_cast %87 : vector<1x16x64xbf16> to vector<16x64xbf16>
    %89 = vector.shape_cast %86 : vector<16x64xbf16> to vector<1x16x64xbf16>
    tpu.vector_store %arg6[%c0_53, %c0_54, %c0_55], %89 {strides = array<i32>} : memref<1x16x64xbf16, #tpu.memory_space<vmem>>, vector<1x16x64xbf16>,
    return
  }
  func.func @transform_0(%arg0: i32) -> (i32, i32, i32) {
    %c0_i32 = arith.constant 0 : i32
    %c0_i32_0 = arith.constant 0 : i32
    %c0_i32_1 = arith.constant 0 : i32
    return %arg0, %c0_i32, %c0_i32_0 : i32, i32, i32
  }
  func.func @transform_1(%arg0: i32) -> (i32, i32, i32) {
    %c0_i32 = arith.constant 0 : i32
    %c0_i32_0 = arith.constant 0 : i32
    %c0_i32_1 = arith.constant 0 : i32
    return %arg0, %c0_i32, %c0_i32_0 : i32, i32, i32
  }
  func.func @transform_2(%arg0: i32) -> (i32, i32) {
    %c0_i32 = arith.constant 0 : i32
    %c0_i32_0 = arith.constant 0 : i32
    %c0_i32_1 = arith.constant 0 : i32
    return %c0_i32, %c0_i32_0 : i32, i32
  }
  func.func @transform_3(%arg0: i32) -> (i32, i32) {
    %c0_i32 = arith.constant 0 : i32
    %c0_i32_0 = arith.constant 0 : i32
    %c0_i32_1 = arith.constant 0 : i32
    return %c0_i32, %c0_i32_0 : i32, i32
  }
  func.func @transform_4(%arg0: i32) -> (i32, i32) {
    %c0_i32 = arith.constant 0 : i32
    %c0_i32_0 = arith.constant 0 : i32
    %c0_i32_1 = arith.constant 0 : i32
    return %c0_i32, %c0_i32_0 : i32, i32
  }
  func.func @transform_5(%arg0: i32) -> (i32, i32, i32) {
    %c0_i32 = arith.constant 0 : i32
    %c0_i32_0 = arith.constant 0 : i32
    %c0_i32_1 = arith.constant 0 : i32
    return %arg0, %c0_i32, %c0_i32_0 : i32, i32, i32
  }
}

</mosaic_0001>

<llo_original>
// kernel: tpu_custom_call.1
$region0: #{tpu_custom_call.1}
  #allocation0 [shape = 'u32[]', space=smem, size = 0x4, offset = 0x4, fixed_abs, tag = 'smem constant byte address 0x4 - core index']
  #allocation1 [shape = 'u32[72,128]{1,0:T(1,128)}', space=vmem, size = 0x9000, scoped, tag = 'internal scratch']
  #allocation2 [shape = 'bf16[16,201]{1,0:T(8,128)(2,1)}', space=vmem, size = 0x2000, scoped, tag = 'scratch operand']
  %s0 = inlined_call_operand.vmem [shape: bf16[2,16,64], index: 0, kind: input, shape index: {}]
  %s1 = inlined_call_operand.hbm [shape: bf16[2,32,64], index: 1, kind: input, shape index: {}]
  %s2 = inlined_call_operand.hbm [shape: bf16[16,32], index: 2, kind: input, shape index: {}]
  %s3 = inlined_call_operand.hbm [shape: bf16[16,144], index: 3, kind: input, shape index: {}]
  %s4 = inlined_call_operand.vmem [shape: f32[16,1], index: 4, kind: input, shape index: {}]
  %s5 = inlined_call_operand.hbm [shape: bf16[2,16,64], index: 5, kind: output, shape index: {}]
  %s6 = sld [smem:[#allocation0]]
  $region65: #{tpu_custom_call.1} parent=0
    _
  %s8 = ssub.s32 1, %s6
  %s9 = scalar_select 0, %s8, %s6
  $region1: #{tpu_custom_call.1} parent=0
    #allocation3 [shape = 'u8[16384]{0}', space=vmem, size = 0x4000, scoped, tag = 'input window, operand 1']
    #allocation4 [shape = 's32[2]{0}', space=sflag, size = 0x8, scoped, tag = 'scoped memory for tpu_custom_call.1']
    #allocation5 [shape = 's32[2]{0}', space=sflag, size = 0x8, scoped, tag = 'scoped memory for tpu_custom_call.1']
    #allocation6 [shape = 'u8[4096]{0}', space=vmem, size = 0x1000, scoped, tag = 'input window, operand 2, single buffered']
    #allocation7 [shape = 's32[1]{0}', space=sflag, size = 0x4, scoped, tag = 'scoped memory for tpu_custom_call.1']
    #allocation8 [shape = 'u8[8192]{0}', space=vmem, size = 0x2000, scoped, tag = 'input window, operand 3, single buffered']
    #allocation9 [shape = 'u8[8192]{0}', space=vmem, size = 0x2000, scoped, tag = 'output window, operand 0']
    %10 = vsyncpa [#allocation4], 0
    %s11 = scalar_lea.sflag [#allocation4], 1
    %12 = vsyncpa %s11, 0
    %13 = vsyncpa [#allocation7], 0
    %14 = vsyncpa [#allocation5], 0
    %s15 = scalar_lea.sflag [#allocation5], 1
    %16 = vsyncpa %s15, 0
    loop: start=0, step=1, limit=4
    $region2: #{tpu_custom_call.1} parent=1 // loop_pre_header
      _
    $region3: #{tpu_custom_call.1} parent=1 // loop_header
      %s18 = sphi 0, %s22
      %p19 = scmp.ge.s32.totalorder %s18, 4
      %s28 = sphi 0, %s30
      %s31 = sphi 0, %s28
      %s32 = sphi 0, %s31
      %s48 = sphi 0, %s32
      %s54 = sphi 0, %s56
      %s57 = sphi 0, %s54
      %s58 = sphi 0, %s57
      %s74 = sphi 0, %s58
      %s78 = sphi 0, %s78
      %s80 = sphi 0, %s78
      %s81 = sphi 0, %s80
      %s95 = sphi 0, %s81
      %s99 = sphi 0, %s99
      %s101 = sphi 0, %s99
      %s102 = sphi 0, %s101
      %s116 = sphi 0, %s102
      %s120 = sphi 0, %s120
      %s122 = sphi 0, %s120
      %s123 = sphi 0, %s122
      %s137 = sphi 0, %s123
      %s143 = sphi 0, %s145
      %s146 = sphi 0, %s143
      %s147 = sphi 0, %s146
      %s163 = sphi 0, %s147
    $region4: #{tpu_custom_call.1} parent=1 // loop_header_branch
      %21 = sbr.rel (%p19) target = $region8
    $region5: #{tpu_custom_call.1} parent=1 // loop_body
      %s23 = ssub.s32 %s18, 1
      %s24 = ssub.s32 %s18, 2
      %s25 = sadd.s32 %s18, 1
      %s26 = ssub.s32 %s18, %s25
      %p27 = scmp.eq.s32.totalorder %s26, 0
      %s29 = sadd.s32 %s28, 1
      %s30 = scalar_select %p27, %s28, %s29
      %p33 = pneg %p27
      %p34 = scmp.eq.s32.totalorder %s18, 1
      %p35 = por %p33, %p34
      %p36 = scmp.ne.s32.totalorder %s28, %s31
      %p37 = scmp.eq.s32.totalorder %s18, 0
      %p38 = por %p36, %p37
      %p39 = scmp.ne.s32.totalorder %s28, %s31
      %p40 = scmp.eq.s32.totalorder %s23, 1
      %p41 = por %p39, %p40
      %p42 = scmp.ne.s32.totalorder %s31, %s32
      %p43 = scmp.eq.s32.totalorder %s23, 0
      %p44 = por %p42, %p43
      %p45 = scmp.ne.s32.totalorder %s31, %s32
      %p46 = scmp.eq.s32.totalorder %s24, 1
      %p47 = por %p45, %p46
      %p49 = scmp.ne.s32.totalorder %s32, %s48
      %p50 = scmp.eq.s32.totalorder %s24, 0
      %p51 = por %p49, %p50
      %s52 = ssub.s32 %s18, %s25
      %p53 = scmp.eq.s32.totalorder %s52, 0
      %s55 = sadd.s32 %s54, 1
      %s56 = scalar_select %p53, %s54, %s55
      %p59 = pneg %p53
      %p60 = scmp.eq.s32.totalorder %s18, 1
      %p61 = por %p59, %p60
      %p62 = scmp.ne.s32.totalorder %s54, %s57
      %p63 = scmp.eq.s32.totalorder %s18, 0
      %p64 = por %p62, %p63
      %p65 = scmp.ne.s32.totalorder %s54, %s57
      %p66 = scmp.eq.s32.totalorder %s23, 1
      %p67 = por %p65, %p66
      %p68 = scmp.ne.s32.totalorder %s57, %s58
      %p69 = scmp.eq.s32.totalorder %s23, 0
      %p70 = por %p68, %p69
      %p71 = scmp.ne.s32.totalorder %s57, %s58
      %p72 = scmp.eq.s32.totalorder %s24, 1
      %p73 = por %p71, %p72
      %p75 = scmp.ne.s32.totalorder %s58, %s74
      %p76 = scmp.eq.s32.totalorder %s24, 0
      %p77 = por %p75, %p76
      %s79 = sadd.s32 %s78, 1
      %p82 = scmp.eq.s32.totalorder %s18, 1
      %p83 = scmp.ne.s32.totalorder %s78, %s80
      %p84 = scmp.eq.s32.totalorder %s18, 0
      %p85 = por %p83, %p84
      %p86 = scmp.ne.s32.totalorder %s78, %s80
      %p87 = scmp.eq.s32.totalorder %s23, 1
      %p88 = por %p86, %p87
      %p89 = scmp.ne.s32.totalorder %s80, %s81
      %p90 = scmp.eq.s32.totalorder %s23, 0
      %p91 = por %p89, %p90
      %p92 = scmp.ne.s32.totalorder %s80, %s81
      %p93 = scmp.eq.s32.totalorder %s24, 1
      %p94 = por %p92, %p93
      %p96 = scmp.ne.s32.totalorder %s81, %s95
      %p97 = scmp.eq.s32.totalorder %s24, 0
      %p98 = por %p96, %p97
      %s100 = sadd.s32 %s99, 1
      %p103 = scmp.eq.s32.totalorder %s18, 1
      %p104 = scmp.ne.s32.totalorder %s99, %s101
      %p105 = scmp.eq.s32.totalorder %s18, 0
      %p106 = por %p104, %p105
      %p107 = scmp.ne.s32.totalorder %s99, %s101
      %p108 = scmp.eq.s32.totalorder %s23, 1
      %p109 = por %p107, %p108
      %p110 = scmp.ne.s32.totalorder %s101, %s102
      %p111 = scmp.eq.s32.totalorder %s23, 0
      %p112 = por %p110, %p111
      %p113 = scmp.ne.s32.totalorder %s101, %s102
      %p114 = scmp.eq.s32.totalorder %s24, 1
      %p115 = por %p113, %p114
      %p117 = scmp.ne.s32.totalorder %s102, %s116
      %p118 = scmp.eq.s32.totalorder %s24, 0
      %p119 = por %p117, %p118
      %s121 = sadd.s32 %s120, 1
      %p124 = scmp.eq.s32.totalorder %s18, 1
      %p125 = scmp.ne.s32.totalorder %s120, %s122
      %p126 = scmp.eq.s32.totalorder %s18, 0
      %p127 = por %p125, %p126
      %p128 = scmp.ne.s32.totalorder %s120, %s122
      %p129 = scmp.eq.s32.totalorder %s23, 1
      %p130 = por %p128, %p129
      %p131 = scmp.ne.s32.totalorder %s122, %s123
      %p132 = scmp.eq.s32.totalorder %s23, 0
      %p133 = por %p131, %p132
      %p134 = scmp.ne.s32.totalorder %s122, %s123
      %p135 = scmp.eq.s32.totalorder %s24, 1
      %p136 = por %p134, %p135
      %p138 = scmp.ne.s32.totalorder %s123, %s137
      %p139 = scmp.eq.s32.totalorder %s24, 0
      %p140 = por %p138, %p139
      %s141 = ssub.s32 %s18, %s25
      %p142 = scmp.eq.s32.totalorder %s141, 0
      %s144 = sadd.s32 %s143, 1
      %s145 = scalar_select %p142, %s143, %s144
      %p148 = pneg %p142
      %p149 = scmp.eq.s32.totalorder %s18, 1
      %p150 = por %p148, %p149
      %p151 = scmp.ne.s32.totalorder %s143, %s146
      %p152 = scmp.eq.s32.totalorder %s18, 0
      %p153 = por %p151, %p152
      %p154 = scmp.ne.s32.totalorder %s143, %s146
      %p155 = scmp.eq.s32.totalorder %s23, 1
      %p156 = por %p154, %p155
      %p157 = scmp.ne.s32.totalorder %s146, %s147
      %p158 = scmp.eq.s32.totalorder %s23, 0
      %p159 = por %p157, %p158
      %p160 = scmp.ne.s32.totalorder %s146, %s147
      %p161 = scmp.eq.s32.totalorder %s24, 1
      %p162 = por %p160, %p161
      %p164 = scmp.ne.s32.totalorder %s147, %s163
      %p165 = scmp.eq.s32.totalorder %s24, 0
      %p166 = por %p164, %p165
      %p167 = scmp.le.s32.totalorder 1, %s18
      %p168 = scmp.lt.s32.totalorder %s18, 3
      %p169 = pnand %p167, %p168
      %p170 = pneg %p169
      // Predicated region
      $region9: #{tpu_custom_call.1} parent=5 // pred_check
        _
      $region10: #{tpu_custom_call.1} parent=5 // pred_check_branch
        %172 = sbr.rel (%p169) target = $region12
      $region11: #{tpu_custom_call.1} parent=5 // pred_region
        %s173 = ssub.s32 %s18, 1
        // Predicated region
        $region13: #{tpu_custom_call.1} parent=11 // pred_check
          %p174 = pneg %p91
        $region14: #{tpu_custom_call.1} parent=11 // pred_check_branch
          %176 = sbr.rel (%p174) target = $region16
        $region15: #{tpu_custom_call.1} parent=11 // pred_region
          %178 = vsyncadd [#allocation7], 0
          %s179 = sshll.u32 %s2, 4
          %s180 = int_to_ptr.hbm [resolvable:$true] %s179
          %s181 = sshll.u32 [#allocation6], 4
          %s182 = int_to_ptr.vmem [resolvable:$true] %s181
          %187 = dma.hbm_to_vmem [thread:$0]  %s180, 128, %s182, [#allocation7], 64, 64, 4
        $region16: #{tpu_custom_call.1} parent=11 // pred_fallthru
          _
        // Predicated region
        $region17: #{tpu_custom_call.1} parent=11 // pred_check
          %p188 = pneg %p112
        $region18: #{tpu_custom_call.1} parent=11 // pred_check_branch
          %190 = sbr.rel (%p188) target = $region20
        $region19: #{tpu_custom_call.1} parent=11 // pred_region
          %192 = vsyncadd [#allocation7], 0
          %s193 = sshll.u32 %s3, 4
          %s194 = int_to_ptr.hbm [resolvable:$true] %s193
          %s195 = sshll.u32 [#allocation8], 4
          %s196 = int_to_ptr.vmem [resolvable:$true] %s195
          %201 = dma.hbm_to_vmem [thread:$0]  %s194, 256, %s196, [#allocation7], 128, 128, 8
        $region20: #{tpu_custom_call.1} parent=11 // pred_fallthru
          _
        // Predicated region
        $region21: #{tpu_custom_call.1} parent=11 // pred_check
          %p202 = pneg %p133
        $region22: #{tpu_custom_call.1} parent=11 // pred_check_branch
          %204 = sbr.rel (%p202) target = $region24
        $region23: #{tpu_custom_call.1} parent=11 // pred_region
          _
        $region24: #{tpu_custom_call.1} parent=11 // pred_fallthru
          _
      $region12: #{tpu_custom_call.1} parent=5 // pred_fallthru
        _
      %p205 = scmp.lt.s32.totalorder %s18, 2
      // Predicated region
      $region25: #{tpu_custom_call.1} parent=5 // pred_check
        %p206 = pneg %p205
      $region26: #{tpu_custom_call.1} parent=5 // pred_check_branch
        %208 = sbr.rel (%p206) target = $region28
      $region27: #{tpu_custom_call.1} parent=5 // pred_region
        // Predicated region
        $region29: #{tpu_custom_call.1} parent=27 // pred_check
          %p209 = pneg %p38
        $region30: #{tpu_custom_call.1} parent=27 // pred_check_branch
          %211 = sbr.rel (%p209) target = $region32
        $region31: #{tpu_custom_call.1} parent=27 // pred_region
          %p212 = scmp.lt.s32.totalorder %s18, 1
          %s213 = scalar_select %p212, %s18, 1
          %s214 = smul.addr %s213, 2
          %s215 = smul.addr %s214, 4
          %s216 = scalar_lea.vmem %s0, %s215
        $region32: #{tpu_custom_call.1} parent=27 // pred_fallthru
          _
        // Predicated region
        $region33: #{tpu_custom_call.1} parent=27 // pred_check
          %p217 = pneg %p64
        $region34: #{tpu_custom_call.1} parent=27 // pred_check_branch
          %219 = sbr.rel (%p217) target = $region36
        $region35: #{tpu_custom_call.1} parent=27 // pred_region
          %s220 = sand.u32 %s54, 1
          %s221 = scalar_lea.sflag [#allocation4], %s220
          %s222 = sand.u32 %s54, 1
          %s223 = smul.addr %s222, 16
          %s224 = scalar_lea.vmem [#allocation3], %s223
          %226 = vsyncadd %s221, 0
          %s227 = smul.addr %s18, 4
          %s228 = smul.addr %s227, 4
          %s229 = scalar_lea.hbm %s1, %s228
          %s230 = sshll.u32 %s229, 4
          %s231 = int_to_ptr.hbm [resolvable:$true] %s230
          %s232 = sshll.u32 %s224, 4
          %s233 = int_to_ptr.vmem [resolvable:$true] %s232
          %238 = dma.hbm_to_vmem [thread:$0]  %s231, 256, %s233, %s221, 64, 64, 4
        $region36: #{tpu_custom_call.1} parent=27 // pred_fallthru
          _
      $region28: #{tpu_custom_call.1} parent=5 // pred_fallthru
        _
      %p239 = scmp.le.s32.totalorder 1, %s18
      %p240 = scmp.lt.s32.totalorder %s18, 3
      %p241 = pnand %p239, %p240
      %p242 = pneg %p241
      // Predicated region
      $region37: #{tpu_custom_call.1} parent=5 // pred_check
        _
      $region38: #{tpu_custom_call.1} parent=5 // pred_check_branch
        %244 = sbr.rel (%p241) target = $region40
      $region39: #{tpu_custom_call.1} parent=5 // pred_region
        %s245 = ssub.s32 %s18, 1
        %s246 = sand.u32 %s57, 1
        %s247 = scalar_lea.sflag [#allocation4], %s246
        %s248 = sand.u32 %s57, 1
        %s249 = smul.addr %s248, 16
        %s250 = scalar_lea.vmem [#allocation3], %s249
        // Predicated region
        $region41: #{tpu_custom_call.1} parent=39 // pred_check
          %p251 = pneg %p70
        $region42: #{tpu_custom_call.1} parent=39 // pred_check_branch
          %253 = sbr.rel (%p251) target = $region44
        $region43: #{tpu_custom_call.1} parent=39 // pred_region
          %255 = dma.done %s247, 256
        $region44: #{tpu_custom_call.1} parent=39 // pred_fallthru
          _
        // Predicated region
        $region45: #{tpu_custom_call.1} parent=39 // pred_check
          %p256 = pneg %p91
        $region46: #{tpu_custom_call.1} parent=39 // pred_check_branch
          %258 = sbr.rel (%p256) target = $region48
        $region47: #{tpu_custom_call.1} parent=39 // pred_region
          %260 = dma.done [#allocation7], 128
        $region48: #{tpu_custom_call.1} parent=39 // pred_fallthru
          _
        // Predicated region
        $region49: #{tpu_custom_call.1} parent=39 // pred_check
          %p261 = pneg %p112
        $region50: #{tpu_custom_call.1} parent=39 // pred_check_branch
          %263 = sbr.rel (%p261) target = $region52
        $region51: #{tpu_custom_call.1} parent=39 // pred_region
          %265 = dma.done [#allocation7], 256
        $region52: #{tpu_custom_call.1} parent=39 // pred_fallthru
          _
        %p266 = scmp.lt.s32.totalorder %s23, 1
        %s267 = scalar_select %p266, %s23, 1
        %s268 = smul.addr %s267, 2
        %s269 = smul.addr %s268, 4
        %s270 = scalar_lea.vmem %s0, %s269
        %p271 = pneg %p44
        %p272 = pneg %p41
        %s273 = sand.u32 %s57, 1
        %s274 = scalar_lea.sflag [#allocation4], %s273
        %s275 = sand.u32 %s57, 1
        %s276 = smul.addr %s275, 16
        %s277 = scalar_lea.vmem [#allocation3], %s276
        %p278 = pneg %p70
        %p279 = pneg %p67
        %p280 = pneg %p91
        %p281 = pneg %p88
        %p282 = pneg %p112
        %p283 = pneg %p109
        %p284 = pneg %p133
        %p285 = pneg %p130
        %p286 = pneg %p159
        %p287 = pneg %p156
        %s288 = sand.u32 %s146, 1
        %s289 = scalar_lea.sflag [#allocation5], %s288
        %s290 = sand.u32 %s146, 1
        %s291 = smul.addr %s290, 8
        %s292 = scalar_lea.vmem [#allocation9], %s291
        %p293 = scmp.lt.s32.totalorder %s23, 1
        %s294 = scalar_select %p293, %s23, 1
        %s295 = smul.addr %s294, 2
        %s296 = smul.addr %s295, 4
        %s297 = scalar_lea.vmem %s0, %s296
        %v301 = vld [vmem:[#allocation6] sm:$0xf]
        %v302 = vld [vmem:[#allocation6 + $0x4] sm:$0xf]
        %v303 = vld [vmem:[%s250] sm:$0xf]
        %v304 = vld [vmem:[%s250 + $0x4] sm:$0xf]
        %v305 = vld [vmem:[%s250 + $0x8] sm:$0xf]
        %v306 = vld [vmem:[%s250 + $0xc] sm:$0xf]
        %v309 = vunpack.c.l.b16 %v301
        %v310 = vunpack.c.l.b16 %v302
        %v311 = vpack.c.b16 %v310, %v309
        %v316 = vunpack.c.l.b16 %v303
        %v317 = vunpack.c.l.b16 %v304
        %v318 = vunpack.c.l.b16 %v305
        %v319 = vunpack.c.l.b16 %v306
        %v320 = vpack.c.b16 %v317, %v316
        %v321 = vpack.c.b16 %v319, %v318
        %vm324 = vcmask 261120
        %v326 = vsel %vm324, %v311, 0
        %328 = vmatpush.bf16.msra.mxu0 0
        %329 = vmatpush.bf16.msra.mxu0 0
        %330 = vmatpush.bf16.msra.mxu0 0
        %331 = vmatpush.bf16.msra.mxu0 0
        %332 = vmatpush.bf16.msra.mxu0 0
        %333 = vmatpush.bf16.msra.mxu0 0
        %334 = vmatpush.bf16.msra.mxu0 %v321
        %335 = vmatpush.bf16.msra.mxu0 %v320
        %336 = vmatmul.bf16.gmra.mxu0 %v326
        %v337 = vpop.f32.mrf.mxu0
        %v338 = vadd.f32 0.0, %v337
        %v339 = vpop.f32.mrf.mxu0
        %v340 = vadd.f32 0.0, %v339
        %341 = vdwg.mxu0
        %v342 = vld [vmem:[%s297] sm:$0xf]
        %v343 = vld [vmem:[%s297 + $0x4] sm:$0xf]
        %v344 = vunpack.c.l.bf16 %v342
        %v345 = vunpack.c.l.bf16 %v343
        %v346 = vadd.f32 %v344, %v338
        %v347 = vadd.f32 %v345, %v340
        %v348 = vpack.c.bf16 %v346, %v346
        %v349 = vpack.c.bf16 %v347, %v347
        %vm350 = vcmask 1044408
        %351 = vst.msk [vmem:[#allocation2] sm:$0xf] %vm350, 0
        %352 = vst.msk [vmem:[#allocation2 + $0x8] sm:$0xf] %vm350, 0
        %vm353 = vcmask 593408
        %354 = vst.msk [vmem:[#allocation2 + $0x4] sm:$0xf] %vm353, 0
        %355 = vst.msk [vmem:[#allocation2 + $0xc] sm:$0xf] %vm353, 0
        %vm356 = vcmask 519168
        %357 = vst.msk [vmem:[#allocation2 + $0x4] sm:$0xf] %vm356, %v348
        %358 = vst.msk [vmem:[#allocation2 + $0xc] sm:$0xf] %vm356, %v349
        %v359 = vlaneseq
        %v360 = vand.u32 %v359, 127
        %v361 = vand.u32 %v360, 7
        %vm362 = vcmp.ne.s32.totalorder %v361, 0
        %vm363 = vcmp.ne.s32.totalorder %v361, 7
        %v364 = vld [vmem:[#allocation2] sm:$0xff]
        %v365 = vld [vmem:[#allocation2 + $0x8] sm:$0xff]
        %v366 = vsel %vm362, 1, 0
        %vm367 = vcmp.eq.s32.totalorder %v366, 1
        %vm368 = vmpackc.low %vm367, %vm367
        %v369 = vsel %vm368, 65537, 0
        %370 = vrot.lane.b32.xlu0 %v369, 119
        %v371 = vpop.permute.xlu0 %370
        %v372 = vrot.slane %v371, 4
        %vm373 = vcmask 973824
        %v374 = vsel %vm373, %v372, %v371
        %v375 = vunpack.c.l.b16 %v374
        %v376 = vunpack.c.h.b16 %v374
        %v377 = vunpack.c.l.b16 0
        %v378 = vunpack.c.h.b16 0
        %vm379 = vcmp.ne.s32.totalorder %v375, %v377
        %vm380 = vcmp.ne.s32.totalorder %v376, %v378
        %vm381 = vmpackc.low %vm380, %vm379
        %v382 = vsel %vm381, %v364, 0
        %v383 = vsel %vm381, %v365, 0
        %v384 = vld [vmem:[#allocation8] sm:$0xf]
        %v385 = vld [vmem:[#allocation8 + $0x8] sm:$0xf]
        %v388 = vunpack.c.l.b16 %v384
        %v389 = vunpack.c.l.b16 %v385
        %v390 = vpack.c.b16 %v389, %v388
        %391 = vrot.lane.b32.xlu0 %v390, 112
        %v392 = vpop.permute.xlu0 %391
        %v395 = vunpack.c.l.b16 %v364
        %v396 = vunpack.c.h.b16 %v364
        %v397 = vunpack.c.l.b16 %v365
        %v398 = vunpack.c.h.b16 %v365
        %v399 = vpack.c.b16 %v397, %v395
        %v400 = vpack.c.b16 %v398, %v396
        %401 = vrot.lane.b32.xlu0 %v399, 8
        %v402 = vpop.permute.xlu0 %401
        %403 = vrot.lane.b32.xlu0 %v400, 8
        %v404 = vpop.permute.xlu0 %403
        %vm405 = vcmask 64512
        %v406 = vsel %vm405, %v402, %v404
        %vm408 = vcmask 130048
        %v410 = vsel %vm408, %v392, 0
        %412 = vmatpush.bf16.msra.mxu0 0
        %413 = vmatpush.bf16.msra.mxu0 0
        %414 = vmatpush.bf16.msra.mxu0 0
        %415 = vmatpush.bf16.msra.mxu0 0
        %416 = vmatpush.bf16.msra.mxu0 0
        %417 = vmatpush.bf16.msra.mxu0 0
        %418 = vmatpush.bf16.msra.mxu0 0
        %419 = vmatpush.bf16.msra.mxu0 %v406
        %420 = vmatmul.bf16.gmra.mxu0 %v410
        %v421 = vpop.f32.mrf.mxu0
        %v422 = vadd.f32 0.0, %v421
        %v423 = vpop.f32.mrf.mxu0
        %v424 = vadd.f32 0.0, %v423
        %425 = vdwg.mxu0
        %v428 = vunpack.c.l.b16 %v382
        %v429 = vunpack.c.h.b16 %v382
        %v430 = vunpack.c.l.b16 %v383
        %v431 = vunpack.c.h.b16 %v383
        %v432 = vpack.c.b16 %v430, %v428
        %v433 = vpack.c.b16 %v431, %v429
        %434 = vrot.lane.b32.xlu0 %v432, 9
        %v435 = vpop.permute.xlu0 %434
        %436 = vrot.lane.b32.xlu0 %v433, 9
        %v437 = vpop.permute.xlu0 %436
        %vm438 = vcmask 72704
        %v439 = vsel %vm438, %v435, %v437
        %v442 = vsel %vm408, %v390, 0
        %444 = vmatpush.bf16.msra.mxu0 0
        %445 = vmatpush.bf16.msra.mxu0 0
        %446 = vmatpush.bf16.msra.mxu0 0
        %447 = vmatpush.bf16.msra.mxu0 0
        %448 = vmatpush.bf16.msra.mxu0 0
        %449 = vmatpush.bf16.msra.mxu0 0
        %450 = vmatpush.bf16.msra.mxu0 0
        %451 = vmatpush.bf16.msra.mxu0 %v439
        %452 = vmatmul.bf16.gmra.mxu0 %v442
        %v453 = vpop.f32.mrf.mxu0
        %v454 = vadd.f32 %v422, %v453
        %v455 = vpop.f32.mrf.mxu0
        %v456 = vadd.f32 %v424, %v455
        %457 = vdwg.mxu0
        %v458 = vsel %vm363, 1, 0
        %vm459 = vcmp.eq.s32.totalorder %v458, 1
        %vm460 = vmpackc.low %vm459, %vm459
        %v461 = vsel %vm460, 65537, 0
        %462 = vrot.lane.b32.xlu0 %v461, 121
        %v463 = vpop.permute.xlu0 %462
        %v464 = vrot.slane %v463, 4
        %vm465 = vcmask 990208
        %v466 = vsel %vm465, %v464, %v463
        %v467 = vunpack.c.l.b16 %v466
        %v468 = vunpack.c.h.b16 %v466
        %v469 = vunpack.c.l.b16 0
        %v470 = vunpack.c.h.b16 0
        %vm471 = vcmp.ne.s32.totalorder %v467, %v469
        %vm472 = vcmp.ne.s32.totalorder %v468, %v470
        %vm473 = vmpackc.low %vm472, %vm471
        %v474 = vsel %vm473, %v364, 0
        %v475 = vsel %vm473, %v365, 0
        %476 = vrot.lane.b32.xlu0 %v390, 96
        %v477 = vpop.permute.xlu0 %476
        %v480 = vunpack.c.l.b16 %v474
        %v481 = vunpack.c.h.b16 %v474
        %v482 = vunpack.c.l.b16 %v475
        %v483 = vunpack.c.h.b16 %v475
        %v484 = vpack.c.b16 %v482, %v480
        %v485 = vpack.c.b16 %v483, %v481
        %486 = vrot.lane.b32.xlu0 %v484, 7
        %v487 = vpop.permute.xlu0 %486
        %488 = vrot.lane.b32.xlu0 %v485, 7
        %v489 = vpop.permute.xlu0 %488
        %vm490 = vcmask 56320
        %v491 = vsel %vm490, %v487, %v489
        %v494 = vsel %vm408, %v477, 0
        %496 = vmatpush.bf16.msra.mxu0 0
        %497 = vmatpush.bf16.msra.mxu0 0
        %498 = vmatpush.bf16.msra.mxu0 0
        %499 = vmatpush.bf16.msra.mxu0 0
        %500 = vmatpush.bf16.msra.mxu0 0
        %501 = vmatpush.bf16.msra.mxu0 0
        %502 = vmatpush.bf16.msra.mxu0 0
        %503 = vmatpush.bf16.msra.mxu0 %v491
        %504 = vmatmul.bf16.gmra.mxu0 %v494
        %v505 = vpop.f32.mrf.mxu0
        %v506 = vadd.f32 0.0, %v505
        %v507 = vpop.f32.mrf.mxu0
        %v508 = vadd.f32 0.0, %v507
        %509 = vdwg.mxu0
        %v510 = vadd.f32 %v454, %v506
        %v511 = vadd.f32 %v456, %v508
        %512 = vrot.lane.b32.xlu0 %v369, 127
        %v513 = vpop.permute.xlu0 %512
        %v514 = vrot.slane %v513, 4
        %vm515 = vcmask 1039360
        %v516 = vsel %vm515, %v514, %v513
        %v517 = vunpack.c.l.b16 %v516
        %v518 = vunpack.c.h.b16 %v516
        %v519 = vunpack.c.l.b16 0
        %v520 = vunpack.c.h.b16 0
        %vm521 = vcmp.ne.s32.totalorder %v517, %v519
        %vm522 = vcmp.ne.s32.totalorder %v518, %v520
        %vm523 = vmpackc.low %vm522, %vm521
        %v524 = vsel %vm523, %v364, 0
        %v525 = vsel %vm523, %v365, 0
        %526 = vrot.lane.b32.xlu0 %v390, 80
        %v527 = vpop.permute.xlu0 %526
        %v530 = vunpack.c.l.b16 %v524
        %v531 = vunpack.c.h.b16 %v524
        %v532 = vunpack.c.l.b16 %v525
        %v533 = vunpack.c.h.b16 %v525
        %v534 = vpack.c.b16 %v532, %v530
        %v535 = vpack.c.b16 %v533, %v531
        %536 = vrot.lane.b32.xlu0 %v534, 1
        %v537 = vpop.permute.xlu0 %536
        %538 = vrot.lane.b32.xlu0 %v535, 1
        %v539 = vpop.permute.xlu0 %538
        %vm540 = vcmask 7168
        %v541 = vsel %vm540, %v537, %v539
        %v544 = vsel %vm408, %v527, 0
        %546 = vmatpush.bf16.msra.mxu0 0
        %547 = vmatpush.bf16.msra.mxu0 0
        %548 = vmatpush.bf16.msra.mxu0 0
        %549 = vmatpush.bf16.msra.mxu0 0
        %550 = vmatpush.bf16.msra.mxu0 0
        %551 = vmatpush.bf16.msra.mxu0 0
        %552 = vmatpush.bf16.msra.mxu0 0
        %553 = vmatpush.bf16.msra.mxu0 %v541
        %554 = vmatmul.bf16.gmra.mxu0 %v544
        %v555 = vpop.f32.mrf.mxu0
        %v556 = vadd.f32 0.0, %v555
        %v557 = vpop.f32.mrf.mxu0
        %v558 = vadd.f32 0.0, %v557
        %559 = vdwg.mxu0
        %v560 = vadd.f32 %v510, %v556
        %v561 = vadd.f32 %v511, %v558
        %v562 = vld [vmem:[#allocation2 + $0x4] sm:$0xf]
        %v563 = vld [vmem:[#allocation2 + $0xc] sm:$0xf]
        %564 = vrot.lane.b32.xlu0 %v390, 64
        %v565 = vpop.permute.xlu0 %564
        %v568 = vunpack.c.l.b16 %v562
        %v569 = vunpack.c.l.b16 %v563
        %v570 = vpack.c.b16 %v569, %v568
        %v573 = vsel %vm408, %v565, 0
        %575 = vmatpush.bf16.msra.mxu0 0
        %576 = vmatpush.bf16.msra.mxu0 0
        %577 = vmatpush.bf16.msra.mxu0 0
        %578 = vmatpush.bf16.msra.mxu0 0
        %579 = vmatpush.bf16.msra.mxu0 0
        %580 = vmatpush.bf16.msra.mxu0 0
        %581 = vmatpush.bf16.msra.mxu0 0
        %582 = vmatpush.bf16.msra.mxu0 %v570
        %583 = vmatmul.bf16.gmra.mxu0 %v573
        %v584 = vpop.f32.mrf.mxu0
        %v585 = vadd.f32 0.0, %v584
        %v586 = vpop.f32.mrf.mxu0
        %v587 = vadd.f32 0.0, %v586
        %588 = vdwg.mxu0
        %v589 = vadd.f32 %v560, %v585
        %v590 = vadd.f32 %v561, %v587
        %591 = vrot.lane.b32.xlu0 %v461, 1
        %v592 = vpop.permute.xlu0 %591
        %v593 = vunpack.c.l.b16 %v592
        %v594 = vunpack.c.h.b16 %v592
        %v595 = vunpack.c.l.b16 0
        %v596 = vunpack.c.h.b16 0
        %vm597 = vcmp.ne.s32.totalorder %v593, %v595
        %vm598 = vcmp.ne.s32.totalorder %v594, %v596
        %vm599 = vmpackc.low %vm598, %vm597
        %v600 = vsel %vm599, %v562, 0
        %v601 = vsel %vm599, %v563, 0
        %602 = vrot.lane.b32.xlu0 %v390, 48
        %v603 = vpop.permute.xlu0 %602
        %v606 = vunpack.c.l.b16 %v600
        %v607 = vunpack.c.l.b16 %v601
        %v608 = vpack.c.b16 %v607, %v606
        %609 = vrot.lane.b32.xlu0 %v608, 127
        %v610 = vpop.permute.xlu0 %609
        %v613 = vsel %vm408, %v603, 0
        %615 = vmatpush.bf16.msra.mxu0 0
        %616 = vmatpush.bf16.msra.mxu0 0
        %617 = vmatpush.bf16.msra.mxu0 0
        %618 = vmatpush.bf16.msra.mxu0 0
        %619 = vmatpush.bf16.msra.mxu0 0
        %620 = vmatpush.bf16.msra.mxu0 0
        %621 = vmatpush.bf16.msra.mxu0 0
        %622 = vmatpush.bf16.msra.mxu0 %v610
        %623 = vmatmul.bf16.gmra.mxu0 %v613
        %v624 = vpop.f32.mrf.mxu0
        %v625 = vadd.f32 0.0, %v624
        %v626 = vpop.f32.mrf.mxu0
        %v627 = vadd.f32 0.0, %v626
        %628 = vdwg.mxu0
        %v629 = vadd.f32 %v589, %v625
        %v630 = vadd.f32 %v590, %v627
        %631 = vrot.lane.b32.xlu0 %v369, 7
        %v632 = vpop.permute.xlu0 %631
        %v633 = vunpack.c.l.b16 %v632
        %v634 = vunpack.c.h.b16 %v632
        %v635 = vunpack.c.l.b16 0
        %v636 = vunpack.c.h.b16 0
        %vm637 = vcmp.ne.s32.totalorder %v633, %v635
        %vm638 = vcmp.ne.s32.totalorder %v634, %v636
        %vm639 = vmpackc.low %vm638, %vm637
        %v640 = vsel %vm639, %v562, 0
        %v641 = vsel %vm639, %v563, 0
        %642 = vrot.lane.b32.xlu0 %v390, 32
        %v643 = vpop.permute.xlu0 %642
        %v646 = vunpack.c.l.b16 %v640
        %v647 = vunpack.c.l.b16 %v641
        %v648 = vpack.c.b16 %v647, %v646
        %649 = vrot.lane.b32.xlu0 %v648, 121
        %v650 = vpop.permute.xlu0 %649
        %v653 = vsel %vm408, %v643, 0
        %655 = vmatpush.bf16.msra.mxu0 0
        %656 = vmatpush.bf16.msra.mxu0 0
        %657 = vmatpush.bf16.msra.mxu0 0
        %658 = vmatpush.bf16.msra.mxu0 0
        %659 = vmatpush.bf16.msra.mxu0 0
        %660 = vmatpush.bf16.msra.mxu0 0
        %661 = vmatpush.bf16.msra.mxu0 0
        %662 = vmatpush.bf16.msra.mxu0 %v650
        %663 = vmatmul.bf16.gmra.mxu0 %v653
        %v664 = vpop.f32.mrf.mxu0
        %v665 = vadd.f32 0.0, %v664
        %v666 = vpop.f32.mrf.mxu0
        %v667 = vadd.f32 0.0, %v666
        %668 = vdwg.mxu0
        %v669 = vadd.f32 %v629, %v665
        %v670 = vadd.f32 %v630, %v667
        %671 = vrot.lane.b32.xlu0 %v390, 16
        %v672 = vpop.permute.xlu0 %671
        %673 = vrot.lane.b32.xlu0 %v570, 120
        %v674 = vpop.permute.xlu0 %673
        %v677 = vsel %vm408, %v672, 0
        %679 = vmatpush.bf16.msra.mxu0 0
        %680 = vmatpush.bf16.msra.mxu0 0
        %681 = vmatpush.bf16.msra.mxu0 0
        %682 = vmatpush.bf16.msra.mxu0 0
        %683 = vmatpush.bf16.msra.mxu0 0
        %684 = vmatpush.bf16.msra.mxu0 0
        %685 = vmatpush.bf16.msra.mxu0 0
        %686 = vmatpush.bf16.msra.mxu0 %v674
        %687 = vmatmul.bf16.gmra.mxu0 %v677
        %v688 = vpop.f32.mrf.mxu0
        %v689 = vadd.f32 0.0, %v688
        %v690 = vpop.f32.mrf.mxu0
        %v691 = vadd.f32 0.0, %v690
        %692 = vdwg.mxu0
        %v693 = vadd.f32 %v669, %v689
        %v694 = vadd.f32 %v670, %v691
        %695 = vrot.lane.b32.xlu0 %v461, 9
        %v696 = vpop.permute.xlu0 %695
        %v697 = vunpack.c.l.b16 %v696
        %v698 = vunpack.c.h.b16 %v696
        %v699 = vunpack.c.l.b16 0
        %v700 = vunpack.c.h.b16 0
        %vm701 = vcmp.ne.s32.totalorder %v697, %v699
        %vm702 = vcmp.ne.s32.totalorder %v698, %v700
        %vm703 = vmpackc.low %vm702, %vm701
        %v704 = vsel %vm703, %v562, 0
        %v705 = vsel %vm703, %v563, 0
        %v706 = vld [vmem:[#allocation8 + $0x4] sm:$0xf]
        %v707 = vld [vmem:[#allocation8 + $0xc] sm:$0xf]
        %v710 = vunpack.c.l.b16 %v706
        %v711 = vunpack.c.l.b16 %v707
        %v712 = vpack.c.b16 %v711, %v710
        %v715 = vunpack.c.l.b16 %v704
        %v716 = vunpack.c.l.b16 %v705
        %v717 = vpack.c.b16 %v716, %v715
        %718 = vrot.lane.b32.xlu0 %v717, 119
        %v719 = vpop.permute.xlu0 %718
        %v722 = vsel %vm408, %v712, 0
        %724 = vmatpush.bf16.msra.mxu0 0
        %725 = vmatpush.bf16.msra.mxu0 0
        %726 = vmatpush.bf16.msra.mxu0 0
        %727 = vmatpush.bf16.msra.mxu0 0
        %728 = vmatpush.bf16.msra.mxu0 0
        %729 = vmatpush.bf16.msra.mxu0 0
        %730 = vmatpush.bf16.msra.mxu0 0
        %731 = vmatpush.bf16.msra.mxu0 %v719
        %732 = vmatmul.bf16.gmra.mxu0 %v722
        %v733 = vpop.f32.mrf.mxu0
        %v734 = vadd.f32 0.0, %v733
        %v735 = vpop.f32.mrf.mxu0
        %v736 = vadd.f32 0.0, %v735
        %737 = vdwg.mxu0
        %v738 = vadd.f32 %v693, %v734
        %v739 = vadd.f32 %v694, %v736
        %v740 = vld [vmem:[%s4] sm:$0xff]
        %v741 = vld [vmem:[%s4 + $0x8] sm:$0xff]
        %743 = vset.pattern.permute.xlu0 0
        %744 = vperm.xlu0 %743, %v740
        %v745 = vpop.permute.xlu0 %744
        %748 = vset.pattern.permute.xlu0 0
        %749 = vperm.xlu0 %748, %v741
        %v750 = vpop.permute.xlu0 %749
        %v752 = vadd.f32 %v738, %v745
        %v753 = vadd.f32 %v739, %v750
        %v754 = vmax.f32 %v752, 0.0
        %v755 = vmax.f32 %v753, 0.0
        %v756 = vpack.c.bf16 %v754, %v754
        %v757 = vpack.c.bf16 %v755, %v755
        %758 = vst.msk [vmem:[%s292] sm:$0xf] %vm356, %v756
        %759 = vst.msk [vmem:[%s292 + $0x4] sm:$0xf] %vm356, %v757
        %s760 = sand.u32 %s146, 1
        %s761 = scalar_lea.sflag [#allocation5], %s760
        %s762 = sand.u32 %s146, 1
        %s763 = smul.addr %s762, 8
        %s764 = scalar_lea.vmem [#allocation9], %s763
        // Predicated region
        $region53: #{tpu_custom_call.1} parent=39 // pred_check
          %p765 = pneg %p156
        $region54: #{tpu_custom_call.1} parent=39 // pred_check_branch
          %767 = sbr.rel (%p765) target = $region56
        $region55: #{tpu_custom_call.1} parent=39 // pred_region
          %769 = vsyncadd %s761, 0
          %s770 = smul.addr %s23, 2
          %s771 = smul.addr %s770, 4
          %s772 = scalar_lea.hbm %s5, %s771
          %s773 = sshll.u32 %s764, 4
          %s774 = int_to_ptr.vmem [resolvable:$true] %s773
          %s775 = sshll.u32 %s772, 4
          %s776 = int_to_ptr.hbm [resolvable:$true] %s775
          %781 = dma.vmem_to_hbm [thread:$0]  %s774, 128, %s776, %s761, 64, 64, 4
        $region56: #{tpu_custom_call.1} parent=39 // pred_fallthru
          _
      $region40: #{tpu_custom_call.1} parent=5 // pred_fallthru
        _
      %p782 = scmp.le.s32.totalorder 2, %s18
      // Predicated region
      $region57: #{tpu_custom_call.1} parent=5 // pred_check
        %p783 = pneg %p782
      $region58: #{tpu_custom_call.1} parent=5 // pred_check_branch
        %785 = sbr.rel (%p783) target = $region60
      $region59: #{tpu_custom_call.1} parent=5 // pred_region
        %s786 = ssub.s32 %s18, 2
        // Predicated region
        $region61: #{tpu_custom_call.1} parent=59 // pred_check
          %p787 = pneg %p162
        $region62: #{tpu_custom_call.1} parent=59 // pred_check_branch
          %789 = sbr.rel (%p787) target = $region64
        $region63: #{tpu_custom_call.1} parent=59 // pred_region
          %s790 = sand.u32 %s147, 1
          %s791 = scalar_lea.sflag [#allocation5], %s790
          %s792 = sand.u32 %s147, 1
          %s793 = smul.addr %s792, 8
          %s794 = scalar_lea.vmem [#allocation9], %s793
          %796 = dma.done %s791, 128
        $region64: #{tpu_custom_call.1} parent=59 // pred_fallthru
          _
      $region60: #{tpu_custom_call.1} parent=5 // pred_fallthru
        _
    $region6: #{tpu_custom_call.1} parent=1 // loop_footer
      %s22 = sadd.s32 1, %s18
    $region7: #{tpu_custom_call.1} parent=1 // loop_footer_branch
      %17 = sbr.rel target = $region3
    $region8: #{tpu_custom_call.1} parent=1 // loop_exit
      _
    %797 = vsyncpa [#allocation4], 1
    %s798 = scalar_lea.sflag [#allocation4], 1
    %799 = vsyncpa %s798, 1
    %800 = vsyncpa [#allocation7], 1
    %801 = vsyncpa [#allocation5], 1
    %s802 = scalar_lea.sflag [#allocation5], 1
    %803 = vsyncpa %s802, 1

</llo_original>
